<compile_context>
chip_gen: v5e
topology: v5e:2x2
jax: 0.10.0
libtpu: 0.0.40
codegen_flags: <defaults>
</compile_context>

<pallas_src>
import functools
import math

import jax
import jax.numpy as jnp
from jax.experimental import pallas as pl
from jax.experimental.pallas import tpu as pltpu

_HIGHEST = jax.lax.Precision.HIGHEST
_MASK_MIN = float(jnp.finfo(jnp.float32).min)


# --------------------------------------------------------------------------
# tiling heuristics
# --------------------------------------------------------------------------
def _seq_tiling(S: int):
    """Returns (tile, padded_S).  Prefer large tiles on every generation: the
    output-tile size is a VMEM / per-step-overhead decision, not an MXU-shape
    one, so no v5e special case."""
    for t in (512, 256, 128):
        if S % t == 0:
            return t, S
    if S <= 512:
        return S, S                        # one full-extent block along seq
    t = 256                                # awkward large S: pad + mask keys
    return t, ((S + t - 1) // t) * t


def _pick_batch_tile(BH: int, S: int, tq: int) -> int:
    """Pack several BH slices per grid step for tiny S (amortize ~0.35us/step)
    while (a) keeping the packed f32 score block <= ~4 MiB for v7x's 64 MiB
    VMEM and (b) leaving >= 2 steps on the parallel axes for megacore."""
    if tq < S or BH == 1:
        return 1
    cap = max(1, 2048 // max(S, 1))
    cap = min(cap, max(1, BH // 2))
    bt = 1
    for d in range(1, min(BH, cap) + 1):
        if BH % d == 0:
            bt = d
    return bt


def _vmem_limit_bytes() -> int:
    try:
        kind = jax.devices()[0].device_kind.lower()
    except Exception:
        kind = ""
    if "v7" in kind:
        return 40 << 20                    # 64 MiB physical on v7x: headroom
    return 96 << 20                        # 128 MiB physical on v5e / v6e


# --------------------------------------------------------------------------
# kernels
# --------------------------------------------------------------------------
def _scores_kernel(q_ref, k_ref, s_ref, *, scale):
    # q_ref: (bt, tq, D), k_ref: (bt, tk, D), s_ref: (bt, tq, tk) f32.
    # Scale folded into q (tq*D muls, not tq*tk).  Full-f32 matmul so these
    # scores are bit-identical to kernel 2's recompute (threshold consistency)
    # and ~match the f32 reference (no quantile-boundary flips).
    q = q_ref[...] * scale
    s_ref[...] = jnp.einsum("bqd,bkd->bqk", q, k_ref[...],
                            preferred_element_type=jnp.float32,
                            precision=_HIGHEST)


def _flash_kernel(thresh_ref, q_ref, k_ref, v_ref, o_ref,
                  qs_sc, m_sc, l_sc, acc_sc, *,
                  scale, use_threshold, pad_keys, kv_len, tk):
    # Flash-style: recompute the score tile, threshold mask, online softmax
    # across the KV grid axis (last, "arbitrary"), exact normalize at the end.
    ki = pl.program_id(2)

    @pl.when(ki == 0)
    def _():
        qs_sc[...] = q_ref[...] * scale            # hoisted out of the KV loop
        m_sc[...] = jnp.full_like(m_sc, -jnp.inf)
        l_sc[...] = jnp.zeros_like(l_sc)
        acc_sc[...] = jnp.zeros_like(acc_sc)

    s = jnp.einsum("bqd,bkd->bqk", qs_sc[...], k_ref[...],
                   preferred_element_type=jnp.float32,
                   precision=_HIGHEST)             # (bt, tq, tk) f32

    if pad_keys:                                   # static: S was padded up
        col = ki * tk + jax.lax.broadcasted_iota(jnp.int32, s.shape, 2)
        s = jnp.where(col < kv_len, s, _MASK_MIN)
    if use_threshold:                              # static: S > 3
        s = jnp.where(s > thresh_ref[0], s, _MASK_MIN)

    m_prev = m_sc[...]
    m_new = jnp.maximum(m_prev, jnp.max(s, axis=-1, keepdims=True))
    alpha = jnp.exp(m_prev - m_new)
    p = jnp.exp(s - m_new)                         # unnormalized
    l_sc[...] = alpha * l_sc[...] + jnp.sum(p, axis=-1, keepdims=True)
    acc_sc[...] = alpha * acc_sc[...] + jnp.einsum(
        "bqk,bkd->bqd", p.astype(v_ref.dtype), v_ref[...],
        preferred_element_type=jnp.float32, precision=_HIGHEST)
    m_sc[...] = m_new

    @pl.when(ki == pl.num_programs(2) - 1)
    def _():
        # Exact divide: runs once per (b, i) tile, off the hot path.
        o_ref[...] = (acc_sc[...] / l_sc[...]).astype(o_ref.dtype)


# --------------------------------------------------------------------------
# wrapper
# --------------------------------------------------------------------------
def psi_sparse_attention(q, k, v, sparsity):
    """Pallas TPU implementation of PsiSparseAttention.forward."""
    *batch, S, D = q.shape
    BH = math.prod(batch)
    qf = q.reshape(BH, S, D)
    kf = k.reshape(BH, S, D)
    vf = v.reshape(BH, S, D)
    scale = 1.0 / math.sqrt(D)

    tile, S_pad = _seq_tiling(S)
    if S_pad != S:
        pad = ((0, 0), (0, S_pad - S), (0, 0))
        qf, kf, vf = (jnp.pad(x, pad) for x in (qf, kf, vf))
    tq = tk = tile
    bt = _pick_batch_tile(BH, S_pad, tq)
    grid = (BH // bt, S_pad // tq, S_pad // tk)
    vmem_limit = _vmem_limit_bytes()

    use_threshold = S > 3
    if use_threshold:
        # ---- kernel 1: tiled scaled scores; only feeds the global quantile.
        # TODO(synk): torch.quantile is an exact global sort + linear
        # interpolation.  A fused min/max + histogram reduction (threshold from
        # the CDF) or a bf16 score buffer would remove / halve this O(BH*S^2)
        # HBM cost, but both perturb which boundary elements get masked, so the
        # exact-semantics f32 path is kept.
        scores = pl.pallas_call(
            functools.partial(_scores_kernel, scale=scale),
            out_shape=jax.ShapeDtypeStruct((BH, S_pad, S_pad), jnp.float32),
            grid_spec=pltpu.PrefetchScalarGridSpec(
                num_scalar_prefetch=0,
                grid=grid,
                in_specs=[pl.BlockSpec((bt, tq, D), lambda b, i, j: (b, i, 0)),
                          pl.BlockSpec((bt, tk, D), lambda b, i, j: (b, j, 0))],
                out_specs=pl.BlockSpec((bt, tq, tk),
                                       lambda b, i, j: (b, i, j)),
            ),
            compiler_params=pltpu.CompilerParams(
                dimension_semantics=("parallel", "parallel", "parallel"),
                vmem_limit_bytes=vmem_limit),
        )(qf, kf)
        valid = scores if S_pad == S else scores[:, :S, :S]
        threshold = jnp.quantile(valid, sparsity).astype(jnp.float32).reshape(1)
    else:
        threshold = jnp.zeros((1,), jnp.float32)

    # ---- kernel 2: flash-style threshold mask + online softmax + P @ V ----
    # TODO(synk): per-KV-tile max gating (skip fully-masked tiles) is omitted:
    # with a *global* quantile threshold a 256^2-element dense tile is
    # essentially never fully masked unless sparsity ~ 1.
    out = pl.pallas_call(
        functools.partial(_flash_kernel, scale=scale,
                          use_threshold=use_threshold,
                          pad_keys=(S_pad != S), kv_len=S, tk=tk),
        out_shape=jax.ShapeDtypeStruct((BH, S_pad, D), q.dtype),
        grid_spec=pltpu.PrefetchScalarGridSpec(
            num_scalar_prefetch=1,
            grid=grid,
            in_specs=[
                pl.BlockSpec((bt, tq, D), lambda b, i, j, thr: (b, i, 0)),
                pl.BlockSpec((bt, tk, D), lambda b, i, j, thr: (b, j, 0)),
                pl.BlockSpec((bt, tk, D), lambda b, i, j, thr: (b, j, 0)),
            ],
            out_specs=pl.BlockSpec((bt, tq, D), lambda b, i, j, thr: (b, i, 0)),
            scratch_shapes=[pltpu.VMEM((bt, tq, D), q.dtype),      # scaled q
                            pltpu.VMEM((bt, tq, 1), jnp.float32),  # m
                            pltpu.VMEM((bt, tq, 1), jnp.float32),  # l
                            pltpu.VMEM((bt, tq, D), jnp.float32)], # acc
        ),
        compiler_params=pltpu.CompilerParams(
            dimension_semantics=("parallel", "parallel", "arbitrary"),
            vmem_limit_bytes=vmem_limit),
    )(threshold, qf, kf, vf)

    if S_pad != S:
        out = out[:, :S, :]
    return out.reshape(*batch, S, D)


def psi_sparse_attention_ref(q, k, v, sparsity):
    """Plain-JAX reference mirroring the PyTorch forward (full-f32 matmuls)."""
    D = q.shape[-1]
    s = jnp.einsum("...qd,...kd->...qk", q, k,
                   precision=_HIGHEST) / math.sqrt(D)
    if q.shape[-2] > 3:
        t = jnp.quantile(s, sparsity)
        s = jnp.where(s > t, s, jnp.finfo(s.dtype).min)
    p = jax.nn.softmax(s, axis=-1)
    return jnp.einsum("...qk,...kd->...qd", p, v, precision=_HIGHEST)


class PsiSparseAttention:
    """Parameter-free module: only holds the sparsity level derived from a
    'psi vector' efficiency value (deterministic, in-script)."""

    def __init__(self, efficiency: float, factor: float = 0.5):
        self.sparsity = float(min(max(efficiency * factor, 0.0), 1.0))

    def __call__(self, q, k, v):
        return psi_sparse_attention(q, k, v, self.sparsity)


if __name__ == "__main__":
    # Small deterministic shapes: batch=2, heads=4, seq=8 (>3 so the sparse
    # path is exercised), head_dim=32.
    B, H, S, D = 2, 4, 8, 32
    key = jax.random.PRNGKey(0)
    kq, kk, kv_ = jax.random.split(key, 3)
    q = jax.random.normal(kq, (B, H, S, D), dtype=jnp.float32)
    k = jax.random.normal(kk, (B, H, S, D), dtype=jnp.float32)
    v = jax.random.normal(kv_, (B, H, S, D), dtype=jnp.float32)

    # Deterministic "psi vector": efficiency=0.8, factor=0.5 -> sparsity 0.4
    attn = PsiSparseAttention(efficiency=0.8, factor=0.5)

    out = jax.block_until_ready(attn(q, k, v))

    ref = psi_sparse_attention_ref(q, k, v, attn.sparsity)
    assert out.shape == (B, H, S, D)
    assert jnp.allclose(out, ref, atol=1e-3, rtol=1e-3), "mismatch vs reference"

    print("KERNEL_OK")
</pallas_src>

<mosaic_0001>
module attributes {stable_mosaic.version = 11 : i64} {
  func.func @_scores_kernel(%arg0: i32, %arg1: i32, %arg2: i32, %arg3: memref<4x8x32xf32, #tpu.memory_space<vmem>>, %arg4: memref<4x8x32xf32, #tpu.memory_space<vmem>>, %arg5: memref<4x8x8xf32, #tpu.memory_space<vmem>>) attributes {dimension_semantics = [#tpu.dimension_semantics<parallel>, #tpu.dimension_semantics<parallel>, #tpu.dimension_semantics<parallel>], iteration_bounds = array<i64: 2, 1, 1>, scalar_prefetch = 0 : i64, scratch_operands = 0 : i64, tpu.core_type = #tpu.core_type<tc>, window_params = [{transform_indices = @transform_0, window_bounds = array<i64: 4, 8, 32>}, {transform_indices = @transform_1, window_bounds = array<i64: 4, 8, 32>}, {transform_indices = @transform_2, window_bounds = array<i64: 4, 8, 8>}]} {
    %c0 = arith.constant 0 : index
    %c0_0 = arith.constant 0 : index
    %c0_1 = arith.constant 0 : index
    %0 = vector.load %arg3[%c0, %c0_0, %c0_1] : memref<4x8x32xf32, #tpu.memory_space<vmem>>, vector<4x8x32xf32>
    %cst = arith.constant 0.176776692 : f32
    %1 = vector.broadcast %cst : f32 to vector<4x8x32xf32>
    %2 = arith.mulf %0, %1 : vector<4x8x32xf32>
    %c0_2 = arith.constant 0 : index
    %c0_3 = arith.constant 0 : index
    %c0_4 = arith.constant 0 : index
    %3 = vector.load %arg4[%c0_2, %c0_3, %c0_4] : memref<4x8x32xf32, #tpu.memory_space<vmem>>, vector<4x8x32xf32>
    "tpu.trace_start"() <{level = 10 : i32, message = "bqd,bkd->bqk"}> : () -> ()
    %cst_5 = arith.constant dense<0.000000e+00> : vector<4x8x8xf32>
    %4 = tpu.matmul %2, %3, %cst_5 {dimension_numbers = #tpu.dot_dimension_numbers<[2], [2], [1], [1], [0, 0, 0, 1, 1, 1], [0], [0]>, precision = #tpu.contract_precision<fp32>} : vector<4x8x32xf32>, vector<4x8x32xf32>, vector<4x8x8xf32> -> vector<4x8x8xf32>
    "tpu.trace_stop"() : () -> ()
    %c0_6 = arith.constant 0 : index
    %c0_7 = arith.constant 0 : index
    %c0_8 = arith.constant 0 : index
    %5 = vector.load %arg5[%c0_6, %c0_7, %c0_8] : memref<4x8x8xf32, #tpu.memory_space<vmem>>, vector<4x8x8xf32>
    tpu.vector_store %arg5[%c0_6, %c0_7, %c0_8], %4 {strides = array<i32>} : memref<4x8x8xf32, #tpu.memory_space<vmem>>, vector<4x8x8xf32>,
    return
  }
  func.func @transform_0(%arg0: i32, %arg1: i32, %arg2: i32) -> (i32, i32, i32) {
    %c0_i32 = arith.constant 0 : i32
    %c0_i32_0 = arith.constant 0 : i32
    return %arg0, %arg1, %c0_i32 : i32, i32, i32
  }
  func.func @transform_1(%arg0: i32, %arg1: i32, %arg2: i32) -> (i32, i32, i32) {
    %c0_i32 = arith.constant 0 : i32
    %c0_i32_0 = arith.constant 0 : i32
    return %arg0, %arg2, %c0_i32 : i32, i32, i32
  }
  func.func @transform_2(%arg0: i32, %arg1: i32, %arg2: i32) -> (i32, i32, i32) {
    %c0_i32 = arith.constant 0 : i32
    return %arg0, %arg1, %arg2 : i32, i32, i32
  }
}

</mosaic_0001>

<llo_original>
// kernel: tpu_custom_call.1
$region0: #{tpu_custom_call.1}
  #allocation0 [shape = 'u32[]', space=smem, size = 0x4, offset = 0x4, fixed_abs, tag = 'smem constant byte address 0x4 - core index']
  #allocation1 [shape = 'u32[72,128]{1,0:T(1,128)}', space=vmem, size = 0x9000, scoped, tag = 'internal scratch']
  %s0 = inlined_call_operand.hbm [shape: f32[8,8,32], index: 0, kind: input, shape index: {}]
  %s1 = inlined_call_operand.hbm [shape: f32[8,8,32], index: 1, kind: input, shape index: {}]
  %s2 = inlined_call_operand.hbm [shape: f32[8,8,8], index: 2, kind: output, shape index: {}]
  %s3 = sld [smem:[#allocation0]]
  $region49: #{tpu_custom_call.1} parent=0
    _
  %s5 = ssub.s32 1, %s3
  %s6 = scalar_select 0, %s5, %s3
  $region1: #{tpu_custom_call.1} parent=0
    #allocation2 [shape = 'u8[32768]{0}', space=vmem, size = 0x8000, scoped, tag = 'input window, operand 0']
    #allocation3 [shape = 's32[2]{0}', space=sflag, size = 0x8, scoped, tag = 'scoped memory for tpu_custom_call.1']
    #allocation4 [shape = 's32[2]{0}', space=sflag, size = 0x8, scoped, tag = 'scoped memory for tpu_custom_call.1']
    #allocation5 [shape = 'u8[32768]{0}', space=vmem, size = 0x8000, scoped, tag = 'input window, operand 1']
    #allocation6 [shape = 's32[2]{0}', space=sflag, size = 0x8, scoped, tag = 'scoped memory for tpu_custom_call.1']
    #allocation7 [shape = 'u8[32768]{0}', space=vmem, size = 0x8000, scoped, tag = 'output window, operand 0']
    %7 = vsyncpa [#allocation3], 0
    %s8 = scalar_lea.sflag [#allocation3], 1
    %9 = vsyncpa %s8, 0
    %10 = vsyncpa [#allocation6], 0
    %s11 = scalar_lea.sflag [#allocation6], 1
    %12 = vsyncpa %s11, 0
    %13 = vsyncpa [#allocation4], 0
    %s14 = scalar_lea.sflag [#allocation4], 1
    %15 = vsyncpa %s14, 0
    loop: start=0, step=1, limit=4
    $region2: #{tpu_custom_call.1} parent=1 // loop_pre_header
      _
    $region3: #{tpu_custom_call.1} parent=1 // loop_header
      %s17 = sphi 0, %s21
      %p18 = scmp.ge.s32.totalorder %s17, 4
      %s24 = sphi 0, %s43
      %s25 = sphi 0, %s39
      %s26 = sphi 0, %s35
      %s27 = sphi 0, %s24
      %s28 = sphi 0, %s25
      %s29 = sphi 0, %s26
      %s30 = sphi 0, %s27
      %s31 = sphi 0, %s28
      %s32 = sphi 0, %s29
      %s48 = sphi 0, %s50
      %s51 = sphi 0, %s48
      %s52 = sphi 0, %s51
      %s68 = sphi 0, %s52
      %s76 = sphi 0, %s78
      %s79 = sphi 0, %s76
      %s80 = sphi 0, %s79
      %s96 = sphi 0, %s80
      %s106 = sphi 0, %s108
      %s109 = sphi 0, %s106
      %s110 = sphi 0, %s109
      %s126 = sphi 0, %s110
    $region4: #{tpu_custom_call.1} parent=1 // loop_header_branch
      %20 = sbr.rel (%p18) target = $region8
    $region5: #{tpu_custom_call.1} parent=1 // loop_body
      %s22 = ssub.s32 %s17, 1
      %s23 = ssub.s32 %s17, 2
      %s33 = sadd.s32 1, %s26
      %p34 = scmp.ge.s32.totalorder %s33, 1
      %s35 = scalar_select %p34, 0, %s33
      %s36 = sadd.s32 1, %s25
      %s37 = scalar_select %p34, %s36, %s25
      %p38 = scmp.ge.s32.totalorder %s37, 1
      %s39 = scalar_select %p38, 0, %s37
      %s40 = sadd.s32 1, %s24
      %s41 = scalar_select %p38, %s40, %s24
      %p42 = scmp.ge.s32.totalorder %s41, 2
      %s43 = scalar_select %p42, 0, %s41
      %s44 = ssub.s32 %s24, %s43
      %s45 = ssub.s32 %s25, %s39
      %s46 = sor.u32 %s44, %s45
      %p47 = scmp.eq.s32.totalorder %s46, 0
      %s49 = sadd.s32 %s48, 1
      %s50 = scalar_select %p47, %s48, %s49
      %p53 = pneg %p47
      %p54 = scmp.eq.s32.totalorder %s17, 1
      %p55 = por %p53, %p54
      %p56 = scmp.ne.s32.totalorder %s48, %s51
      %p57 = scmp.eq.s32.totalorder %s17, 0
      %p58 = por %p56, %p57
      %p59 = scmp.ne.s32.totalorder %s48, %s51
      %p60 = scmp.eq.s32.totalorder %s22, 1
      %p61 = por %p59, %p60
      %p62 = scmp.ne.s32.totalorder %s51, %s52
      %p63 = scmp.eq.s32.totalorder %s22, 0
      %p64 = por %p62, %p63
      %p65 = scmp.ne.s32.totalorder %s51, %s52
      %p66 = scmp.eq.s32.totalorder %s23, 1
      %p67 = por %p65, %p66
      %p69 = scmp.ne.s32.totalorder %s52, %s68
      %p70 = scmp.eq.s32.totalorder %s23, 0
      %p71 = por %p69, %p70
      %s72 = ssub.s32 %s24, %s43
      %s73 = ssub.s32 %s26, %s35
      %s74 = sor.u32 %s72, %s73
      %p75 = scmp.eq.s32.totalorder %s74, 0
      %s77 = sadd.s32 %s76, 1
      %s78 = scalar_select %p75, %s76, %s77
      %p81 = pneg %p75
      %p82 = scmp.eq.s32.totalorder %s17, 1
      %p83 = por %p81, %p82
      %p84 = scmp.ne.s32.totalorder %s76, %s79
      %p85 = scmp.eq.s32.totalorder %s17, 0
      %p86 = por %p84, %p85
      %p87 = scmp.ne.s32.totalorder %s76, %s79
      %p88 = scmp.eq.s32.totalorder %s22, 1
      %p89 = por %p87, %p88
      %p90 = scmp.ne.s32.totalorder %s79, %s80
      %p91 = scmp.eq.s32.totalorder %s22, 0
      %p92 = por %p90, %p91
      %p93 = scmp.ne.s32.totalorder %s79, %s80
      %p94 = scmp.eq.s32.totalorder %s23, 1
      %p95 = por %p93, %p94
      %p97 = scmp.ne.s32.totalorder %s80, %s96
      %p98 = scmp.eq.s32.totalorder %s23, 0
      %p99 = por %p97, %p98
      %s100 = ssub.s32 %s24, %s43
      %s101 = ssub.s32 %s25, %s39
      %s102 = sor.u32 %s100, %s101
      %s103 = ssub.s32 %s26, %s35
      %s104 = sor.u32 %s102, %s103
      %p105 = scmp.eq.s32.totalorder %s104, 0
      %s107 = sadd.s32 %s106, 1
      %s108 = scalar_select %p105, %s106, %s107
      %p111 = pneg %p105
      %p112 = scmp.eq.s32.totalorder %s17, 1
      %p113 = por %p111, %p112
      %p114 = scmp.ne.s32.totalorder %s106, %s109
      %p115 = scmp.eq.s32.totalorder %s17, 0
      %p116 = por %p114, %p115
      %p117 = scmp.ne.s32.totalorder %s106, %s109
      %p118 = scmp.eq.s32.totalorder %s22, 1
      %p119 = por %p117, %p118
      %p120 = scmp.ne.s32.totalorder %s109, %s110
      %p121 = scmp.eq.s32.totalorder %s22, 0
      %p122 = por %p120, %p121
      %p123 = scmp.ne.s32.totalorder %s109, %s110
      %p124 = scmp.eq.s32.totalorder %s23, 1
      %p125 = por %p123, %p124
      %p127 = scmp.ne.s32.totalorder %s110, %s126
      %p128 = scmp.eq.s32.totalorder %s23, 0
      %p129 = por %p127, %p128
      %p130 = scmp.le.s32.totalorder 1, %s17
      %p131 = scmp.lt.s32.totalorder %s17, 3
      %p132 = pnand %p130, %p131
      %p133 = pneg %p132
      // Predicated region
      $region9: #{tpu_custom_call.1} parent=5 // pred_check
        _
      $region10: #{tpu_custom_call.1} parent=5 // pred_check_branch
        %135 = sbr.rel (%p132) target = $region12
      $region11: #{tpu_custom_call.1} parent=5 // pred_region
        %s136 = ssub.s32 %s17, 1
      $region12: #{tpu_custom_call.1} parent=5 // pred_fallthru
        _
      %p137 = scmp.lt.s32.totalorder %s17, 2
      // Predicated region
      $region13: #{tpu_custom_call.1} parent=5 // pred_check
        %p138 = pneg %p137
      $region14: #{tpu_custom_call.1} parent=5 // pred_check_branch
        %140 = sbr.rel (%p138) target = $region16
      $region15: #{tpu_custom_call.1} parent=5 // pred_region
        // Predicated region
        $region17: #{tpu_custom_call.1} parent=15 // pred_check
          %p141 = pneg %p58
        $region18: #{tpu_custom_call.1} parent=15 // pred_check_branch
          %143 = sbr.rel (%p141) target = $region20
        $region19: #{tpu_custom_call.1} parent=15 // pred_region
          %s144 = sand.u32 %s48, 1
          %s145 = scalar_lea.sflag [#allocation3], %s144
          %s146 = sand.u32 %s48, 1
          %s147 = smul.addr %s146, 32
          %s148 = scalar_lea.vmem [#allocation2], %s147
          %s149 = smul.u32 4, %s24
          %151 = vsyncadd %s145, 0
          %s152 = sadd.s32 %s25, %s149
          %s153 = smul.addr %s152, 8
          %s154 = scalar_lea.hbm %s0, %s153
          %s155 = sshll.u32 %s154, 4
          %s156 = int_to_ptr.hbm [resolvable:$true] %s155
          %s157 = sshll.u32 %s148, 4
          %s158 = int_to_ptr.vmem [resolvable:$true] %s157
          %163 = dma.hbm_to_vmem [thread:$0]  %s156, 512, %s158, %s145, 128, 128, 8
        $region20: #{tpu_custom_call.1} parent=15 // pred_fallthru
          _
        // Predicated region
        $region21: #{tpu_custom_call.1} parent=15 // pred_check
          %p164 = pneg %p86
        $region22: #{tpu_custom_call.1} parent=15 // pred_check_branch
          %166 = sbr.rel (%p164) target = $region24
        $region23: #{tpu_custom_call.1} parent=15 // pred_region
          %s167 = sand.u32 %s76, 1
          %s168 = scalar_lea.sflag [#allocation6], %s167
          %s169 = sand.u32 %s76, 1
          %s170 = smul.addr %s169, 32
          %s171 = scalar_lea.vmem [#allocation5], %s170
          %s172 = smul.u32 4, %s24
          %174 = vsyncadd %s168, 0
          %s175 = sadd.s32 %s26, %s172
          %s176 = smul.addr %s175, 8
          %s177 = scalar_lea.hbm %s1, %s176
          %s178 = sshll.u32 %s177, 4
          %s179 = int_to_ptr.hbm [resolvable:$true] %s178
          %s180 = sshll.u32 %s171, 4
          %s181 = int_to_ptr.vmem [resolvable:$true] %s180
          %186 = dma.hbm_to_vmem [thread:$0]  %s179, 512, %s181, %s168, 128, 128, 8
        $region24: #{tpu_custom_call.1} parent=15 // pred_fallthru
          _
      $region16: #{tpu_custom_call.1} parent=5 // pred_fallthru
        _
      %p187 = scmp.le.s32.totalorder 1, %s17
      %p188 = scmp.lt.s32.totalorder %s17, 3
      %p189 = pnand %p187, %p188
      %p190 = pneg %p189
      // Predicated region
      $region25: #{tpu_custom_call.1} parent=5 // pred_check
        _
      $region26: #{tpu_custom_call.1} parent=5 // pred_check_branch
        %192 = sbr.rel (%p189) target = $region28
      $region27: #{tpu_custom_call.1} parent=5 // pred_region
        %s193 = ssub.s32 %s17, 1
        %s194 = sand.u32 %s51, 1
        %s195 = scalar_lea.sflag [#allocation3], %s194
        %s196 = sand.u32 %s51, 1
        %s197 = smul.addr %s196, 32
        %s198 = scalar_lea.vmem [#allocation2], %s197
        // Predicated region
        $region29: #{tpu_custom_call.1} parent=27 // pred_check
          %p199 = pneg %p64
        $region30: #{tpu_custom_call.1} parent=27 // pred_check_branch
          %201 = sbr.rel (%p199) target = $region32
        $region31: #{tpu_custom_call.1} parent=27 // pred_region
          %203 = dma.done %s195, 512
        $region32: #{tpu_custom_call.1} parent=27 // pred_fallthru
          _
        %s204 = sand.u32 %s79, 1
        %s205 = scalar_lea.sflag [#allocation6], %s204
        %s206 = sand.u32 %s79, 1
        %s207 = smul.addr %s206, 32
        %s208 = scalar_lea.vmem [#allocation5], %s207
        // Predicated region
        $region33: #{tpu_custom_call.1} parent=27 // pred_check
          %p209 = pneg %p92
        $region34: #{tpu_custom_call.1} parent=27 // pred_check_branch
          %211 = sbr.rel (%p209) target = $region36
        $region35: #{tpu_custom_call.1} parent=27 // pred_region
          %213 = dma.done %s205, 512
        $region36: #{tpu_custom_call.1} parent=27 // pred_fallthru
          _
        %s214 = sand.u32 %s51, 1
        %s215 = scalar_lea.sflag [#allocation3], %s214
        %s216 = sand.u32 %s51, 1
        %s217 = smul.addr %s216, 32
        %s218 = scalar_lea.vmem [#allocation2], %s217
        %p219 = pneg %p64
        %p220 = pneg %p61
        %s221 = sand.u32 %s79, 1
        %s222 = scalar_lea.sflag [#allocation6], %s221
        %s223 = sand.u32 %s79, 1
        %s224 = smul.addr %s223, 32
        %s225 = scalar_lea.vmem [#allocation5], %s224
        %p226 = pneg %p92
        %p227 = pneg %p89
        %p228 = pneg %p122
        %p229 = pneg %p119
        %s230 = sand.u32 %s109, 1
        %s231 = scalar_lea.sflag [#allocation4], %s230
        %s232 = sand.u32 %s109, 1
        %s233 = smul.addr %s232, 32
        %s234 = scalar_lea.vmem [#allocation7], %s233
        %s235 = smul.u32 4, %s27
        %s236 = smul.u32 4, %s27
        %s237 = smul.u32 4, %s27
        %v238 = vld [vmem:[%s198] sm:$0xff]
        %v239 = vld [vmem:[%s198 + $0x8] sm:$0xff]
        %v240 = vld [vmem:[%s198 + $0x10] sm:$0xff]
        %v241 = vld [vmem:[%s198 + $0x18] sm:$0xff]
        %v242 = vmul.f32 %v238, 0.17677669
        %v243 = vmul.f32 %v239, 0.17677669
        %v244 = vmul.f32 %v240, 0.17677669
        %v245 = vmul.f32 %v241, 0.17677669
        %v246 = vld [vmem:[%s208] sm:$0xff]
        %v247 = vld [vmem:[%s208 + $0x8] sm:$0xff]
        %v248 = vld [vmem:[%s208 + $0x10] sm:$0xff]
        %v249 = vld [vmem:[%s208 + $0x18] sm:$0xff]
        %vm250 = vcmask 261120
        %v252 = vsel %vm250, %v242, 0
        %v255 = vsel %vm250, %v246, 0
        %257 = vmatpush.xpose.msra.mxu0 0.0
        %258 = vmatpush.xpose.msra.mxu0 0.0
        %259 = vmatpush.xpose.msra.mxu0 0.0
        %260 = vmatpush.xpose.msra.mxu0 0.0
        %261 = vmatpush.xpose.msra.mxu0 0.0
        %262 = vmatpush.xpose.msra.mxu0 0.0
        %263 = vmatpush.xpose.msra.mxu0 0.0
        %264 = vmatpush.xpose.msra.mxu0 0.0
        %265 = vmatpush.xpose.msra.mxu0 0.0
        %266 = vmatpush.xpose.msra.mxu0 0.0
        %267 = vmatpush.xpose.msra.mxu0 0.0
        %268 = vmatpush.xpose.msra.mxu0 0.0
        %269 = vmatpush.xpose.msra.mxu0 0.0
        %270 = vmatpush.xpose.msra.mxu0 0.0
        %271 = vmatpush.xpose.msra.mxu0 0.0
        %v272 = vand.u32 %v255, 4294901760
        %273 = vmatpush.xpose.msra.mxu0 %v272
        %v274 = vand.u32 %v252, 4294901760
        %v275 = vsub.f32 %v252, %v274
        %v276 = vand.u32 %v275, 4294901760
        %v277 = vsub.f32 %v275, %v276
        %v278 = vand.u32 %v277, 4294901760
        %279 = vmatmul.f32.gmra.mxu0 %v278
        %v280 = vpop.f32.mrf.mxu0
        %v281 = vadd.f32 0.0, %v280
        %282 = vdwg.mxu0
        %283 = vmatpush.xpose.msra.mxu0 0.0
        %284 = vmatpush.xpose.msra.mxu0 0.0
        %285 = vmatpush.xpose.msra.mxu0 0.0
        %286 = vmatpush.xpose.msra.mxu0 0.0
        %287 = vmatpush.xpose.msra.mxu0 0.0
        %288 = vmatpush.xpose.msra.mxu0 0.0
        %289 = vmatpush.xpose.msra.mxu0 0.0
        %290 = vmatpush.xpose.msra.mxu0 0.0
        %291 = vmatpush.xpose.msra.mxu0 0.0
        %292 = vmatpush.xpose.msra.mxu0 0.0
        %293 = vmatpush.xpose.msra.mxu0 0.0
        %294 = vmatpush.xpose.msra.mxu0 0.0
        %295 = vmatpush.xpose.msra.mxu0 0.0
        %296 = vmatpush.xpose.msra.mxu0 0.0
        %297 = vmatpush.xpose.msra.mxu0 0.0
        %v298 = vand.u32 %v255, 4294901760
        %v299 = vsub.f32 %v255, %v298
        %v300 = vand.u32 %v299, 4294901760
        %v301 = vsub.f32 %v299, %v300
        %v302 = vand.u32 %v301, 4294901760
        %303 = vmatpush.xpose.msra.mxu0 %v302
        %v304 = vand.u32 %v252, 4294901760
        %305 = vmatmul.f32.gmra.mxu0 %v304
        %v306 = vpop.f32.mrf.mxu0
        %v307 = vadd.f32 %v281, %v306
        %308 = vdwg.mxu0
        %309 = vmatpush.xpose.msra.mxu0 0.0
        %310 = vmatpush.xpose.msra.mxu0 0.0
        %311 = vmatpush.xpose.msra.mxu0 0.0
        %312 = vmatpush.xpose.msra.mxu0 0.0
        %313 = vmatpush.xpose.msra.mxu0 0.0
        %314 = vmatpush.xpose.msra.mxu0 0.0
        %315 = vmatpush.xpose.msra.mxu0 0.0
        %316 = vmatpush.xpose.msra.mxu0 0.0
        %317 = vmatpush.xpose.msra.mxu0 0.0
        %318 = vmatpush.xpose.msra.mxu0 0.0
        %319 = vmatpush.xpose.msra.mxu0 0.0
        %320 = vmatpush.xpose.msra.mxu0 0.0
        %321 = vmatpush.xpose.msra.mxu0 0.0
        %322 = vmatpush.xpose.msra.mxu0 0.0
        %323 = vmatpush.xpose.msra.mxu0 0.0
        %v324 = vand.u32 %v255, 4294901760
        %v325 = vsub.f32 %v255, %v324
        %326 = vmatpush.xpose.msra.mxu0 %v325
        %v327 = vand.u32 %v252, 4294901760
        %v328 = vsub.f32 %v252, %v327
        %329 = vmatmul.f32.gmra.mxu0 %v328
        %v330 = vpop.f32.mrf.mxu0
        %v331 = vadd.f32 %v307, %v330
        %332 = vdwg.mxu0
        %333 = vmatpush.xpose.msra.mxu0 0.0
        %334 = vmatpush.xpose.msra.mxu0 0.0
        %335 = vmatpush.xpose.msra.mxu0 0.0
        %336 = vmatpush.xpose.msra.mxu0 0.0
        %337 = vmatpush.xpose.msra.mxu0 0.0
        %338 = vmatpush.xpose.msra.mxu0 0.0
        %339 = vmatpush.xpose.msra.mxu0 0.0
        %340 = vmatpush.xpose.msra.mxu0 0.0
        %341 = vmatpush.xpose.msra.mxu0 0.0
        %342 = vmatpush.xpose.msra.mxu0 0.0
        %343 = vmatpush.xpose.msra.mxu0 0.0
        %344 = vmatpush.xpose.msra.mxu0 0.0
        %345 = vmatpush.xpose.msra.mxu0 0.0
        %346 = vmatpush.xpose.msra.mxu0 0.0
        %347 = vmatpush.xpose.msra.mxu0 0.0
        %v348 = vand.u32 %v255, 4294901760
        %349 = vmatpush.xpose.msra.mxu0 %v348
        %v350 = vand.u32 %v252, 4294901760
        %v351 = vsub.f32 %v252, %v350
        %v352 = vand.u32 %v351, 4294901760
        %353 = vmatmul.f32.gmra.mxu0 %v352
        %v354 = vpop.f32.mrf.mxu0
        %v355 = vadd.f32 %v331, %v354
        %356 = vdwg.mxu0
        %357 = vmatpush.xpose.msra.mxu0 0.0
        %358 = vmatpush.xpose.msra.mxu0 0.0
        %359 = vmatpush.xpose.msra.mxu0 0.0
        %360 = vmatpush.xpose.msra.mxu0 0.0
        %361 = vmatpush.xpose.msra.mxu0 0.0
        %362 = vmatpush.xpose.msra.mxu0 0.0
        %363 = vmatpush.xpose.msra.mxu0 0.0
        %364 = vmatpush.xpose.msra.mxu0 0.0
        %365 = vmatpush.xpose.msra.mxu0 0.0
        %366 = vmatpush.xpose.msra.mxu0 0.0
        %367 = vmatpush.xpose.msra.mxu0 0.0
        %368 = vmatpush.xpose.msra.mxu0 0.0
        %369 = vmatpush.xpose.msra.mxu0 0.0
        %370 = vmatpush.xpose.msra.mxu0 0.0
        %371 = vmatpush.xpose.msra.mxu0 0.0
        %v372 = vand.u32 %v255, 4294901760
        %v373 = vsub.f32 %v255, %v372
        %v374 = vand.u32 %v373, 4294901760
        %375 = vmatpush.xpose.msra.mxu0 %v374
        %v376 = vand.u32 %v252, 4294901760
        %377 = vmatmul.f32.gmra.mxu0 %v376
        %v378 = vpop.f32.mrf.mxu0
        %v379 = vadd.f32 %v355, %v378
        %380 = vdwg.mxu0
        %381 = vmatpush.xpose.msra.mxu0 0.0
        %382 = vmatpush.xpose.msra.mxu0 0.0
        %383 = vmatpush.xpose.msra.mxu0 0.0
        %384 = vmatpush.xpose.msra.mxu0 0.0
        %385 = vmatpush.xpose.msra.mxu0 0.0
        %386 = vmatpush.xpose.msra.mxu0 0.0
        %387 = vmatpush.xpose.msra.mxu0 0.0
        %388 = vmatpush.xpose.msra.mxu0 0.0
        %389 = vmatpush.xpose.msra.mxu0 0.0
        %390 = vmatpush.xpose.msra.mxu0 0.0
        %391 = vmatpush.xpose.msra.mxu0 0.0
        %392 = vmatpush.xpose.msra.mxu0 0.0
        %393 = vmatpush.xpose.msra.mxu0 0.0
        %394 = vmatpush.xpose.msra.mxu0 0.0
        %395 = vmatpush.xpose.msra.mxu0 0.0
        %v396 = vand.u32 %v255, 4294901760
        %397 = vmatpush.xpose.msra.mxu0 %v396
        %v398 = vand.u32 %v252, 4294901760
        %399 = vmatmul.f32.gmra.mxu0 %v398
        %v400 = vpop.f32.mrf.mxu0
        %v401 = vadd.f32 %v379, %v400
        %402 = vdwg.mxu0
        %v404 = vsel %vm250, %v243, 0
        %v407 = vsel %vm250, %v247, 0
        %409 = vmatpush.xpose.msra.mxu0 0.0
        %410 = vmatpush.xpose.msra.mxu0 0.0
        %411 = vmatpush.xpose.msra.mxu0 0.0
        %412 = vmatpush.xpose.msra.mxu0 0.0
        %413 = vmatpush.xpose.msra.mxu0 0.0
        %414 = vmatpush.xpose.msra.mxu0 0.0
        %415 = vmatpush.xpose.msra.mxu0 0.0
        %416 = vmatpush.xpose.msra.mxu0 0.0
        %417 = vmatpush.xpose.msra.mxu0 0.0
        %418 = vmatpush.xpose.msra.mxu0 0.0
        %419 = vmatpush.xpose.msra.mxu0 0.0
        %420 = vmatpush.xpose.msra.mxu0 0.0
        %421 = vmatpush.xpose.msra.mxu0 0.0
        %422 = vmatpush.xpose.msra.mxu0 0.0
        %423 = vmatpush.xpose.msra.mxu0 0.0
        %v424 = vand.u32 %v407, 4294901760
        %425 = vmatpush.xpose.msra.mxu0 %v424
        %v426 = vand.u32 %v404, 4294901760
        %v427 = vsub.f32 %v404, %v426
        %v428 = vand.u32 %v427, 4294901760
        %v429 = vsub.f32 %v427, %v428
        %v430 = vand.u32 %v429, 4294901760
        %431 = vmatmul.f32.gmra.mxu0 %v430
        %v432 = vpop.f32.mrf.mxu0
        %v433 = vadd.f32 0.0, %v432
        %434 = vdwg.mxu0
        %435 = vmatpush.xpose.msra.mxu0 0.0
        %436 = vmatpush.xpose.msra.mxu0 0.0
        %437 = vmatpush.xpose.msra.mxu0 0.0
        %438 = vmatpush.xpose.msra.mxu0 0.0
        %439 = vmatpush.xpose.msra.mxu0 0.0
        %440 = vmatpush.xpose.msra.mxu0 0.0
        %441 = vmatpush.xpose.msra.mxu0 0.0
        %442 = vmatpush.xpose.msra.mxu0 0.0
        %443 = vmatpush.xpose.msra.mxu0 0.0
        %444 = vmatpush.xpose.msra.mxu0 0.0
        %445 = vmatpush.xpose.msra.mxu0 0.0
        %446 = vmatpush.xpose.msra.mxu0 0.0
        %447 = vmatpush.xpose.msra.mxu0 0.0
        %448 = vmatpush.xpose.msra.mxu0 0.0
        %449 = vmatpush.xpose.msra.mxu0 0.0
        %v450 = vand.u32 %v407, 4294901760
        %v451 = vsub.f32 %v407, %v450
        %v452 = vand.u32 %v451, 4294901760
        %v453 = vsub.f32 %v451, %v452
        %v454 = vand.u32 %v453, 4294901760
        %455 = vmatpush.xpose.msra.mxu0 %v454
        %v456 = vand.u32 %v404, 4294901760
        %457 = vmatmul.f32.gmra.mxu0 %v456
        %v458 = vpop.f32.mrf.mxu0
        %v459 = vadd.f32 %v433, %v458
        %460 = vdwg.mxu0
        %461 = vmatpush.xpose.msra.mxu0 0.0
        %462 = vmatpush.xpose.msra.mxu0 0.0
        %463 = vmatpush.xpose.msra.mxu0 0.0
        %464 = vmatpush.xpose.msra.mxu0 0.0
        %465 = vmatpush.xpose.msra.mxu0 0.0
        %466 = vmatpush.xpose.msra.mxu0 0.0
        %467 = vmatpush.xpose.msra.mxu0 0.0
        %468 = vmatpush.xpose.msra.mxu0 0.0
        %469 = vmatpush.xpose.msra.mxu0 0.0
        %470 = vmatpush.xpose.msra.mxu0 0.0
        %471 = vmatpush.xpose.msra.mxu0 0.0
        %472 = vmatpush.xpose.msra.mxu0 0.0
        %473 = vmatpush.xpose.msra.mxu0 0.0
        %474 = vmatpush.xpose.msra.mxu0 0.0
        %475 = vmatpush.xpose.msra.mxu0 0.0
        %v476 = vand.u32 %v407, 4294901760
        %v477 = vsub.f32 %v407, %v476
        %478 = vmatpush.xpose.msra.mxu0 %v477
        %v479 = vand.u32 %v404, 4294901760
        %v480 = vsub.f32 %v404, %v479
        %481 = vmatmul.f32.gmra.mxu0 %v480
        %v482 = vpop.f32.mrf.mxu0
        %v483 = vadd.f32 %v459, %v482
        %484 = vdwg.mxu0
        %485 = vmatpush.xpose.msra.mxu0 0.0
        %486 = vmatpush.xpose.msra.mxu0 0.0
        %487 = vmatpush.xpose.msra.mxu0 0.0
        %488 = vmatpush.xpose.msra.mxu0 0.0
        %489 = vmatpush.xpose.msra.mxu0 0.0
        %490 = vmatpush.xpose.msra.mxu0 0.0
        %491 = vmatpush.xpose.msra.mxu0 0.0
        %492 = vmatpush.xpose.msra.mxu0 0.0
        %493 = vmatpush.xpose.msra.mxu0 0.0
        %494 = vmatpush.xpose.msra.mxu0 0.0
        %495 = vmatpush.xpose.msra.mxu0 0.0
        %496 = vmatpush.xpose.msra.mxu0 0.0
        %497 = vmatpush.xpose.msra.mxu0 0.0
        %498 = vmatpush.xpose.msra.mxu0 0.0
        %499 = vmatpush.xpose.msra.mxu0 0.0
        %v500 = vand.u32 %v407, 4294901760
        %501 = vmatpush.xpose.msra.mxu0 %v500
        %v502 = vand.u32 %v404, 4294901760
        %v503 = vsub.f32 %v404, %v502
        %v504 = vand.u32 %v503, 4294901760
        %505 = vmatmul.f32.gmra.mxu0 %v504
        %v506 = vpop.f32.mrf.mxu0
        %v507 = vadd.f32 %v483, %v506
        %508 = vdwg.mxu0
        %509 = vmatpush.xpose.msra.mxu0 0.0
        %510 = vmatpush.xpose.msra.mxu0 0.0
        %511 = vmatpush.xpose.msra.mxu0 0.0
        %512 = vmatpush.xpose.msra.mxu0 0.0
        %513 = vmatpush.xpose.msra.mxu0 0.0
        %514 = vmatpush.xpose.msra.mxu0 0.0
        %515 = vmatpush.xpose.msra.mxu0 0.0
        %516 = vmatpush.xpose.msra.mxu0 0.0
        %517 = vmatpush.xpose.msra.mxu0 0.0
        %518 = vmatpush.xpose.msra.mxu0 0.0
        %519 = vmatpush.xpose.msra.mxu0 0.0
        %520 = vmatpush.xpose.msra.mxu0 0.0
        %521 = vmatpush.xpose.msra.mxu0 0.0
        %522 = vmatpush.xpose.msra.mxu0 0.0
        %523 = vmatpush.xpose.msra.mxu0 0.0
        %v524 = vand.u32 %v407, 4294901760
        %v525 = vsub.f32 %v407, %v524
        %v526 = vand.u32 %v525, 4294901760
        %527 = vmatpush.xpose.msra.mxu0 %v526
        %v528 = vand.u32 %v404, 4294901760
        %529 = vmatmul.f32.gmra.mxu0 %v528
        %v530 = vpop.f32.mrf.mxu0
        %v531 = vadd.f32 %v507, %v530
        %532 = vdwg.mxu0
        %533 = vmatpush.xpose.msra.mxu0 0.0
        %534 = vmatpush.xpose.msra.mxu0 0.0
        %535 = vmatpush.xpose.msra.mxu0 0.0
        %536 = vmatpush.xpose.msra.mxu0 0.0
        %537 = vmatpush.xpose.msra.mxu0 0.0
        %538 = vmatpush.xpose.msra.mxu0 0.0
        %539 = vmatpush.xpose.msra.mxu0 0.0
        %540 = vmatpush.xpose.msra.mxu0 0.0
        %541 = vmatpush.xpose.msra.mxu0 0.0
        %542 = vmatpush.xpose.msra.mxu0 0.0
        %543 = vmatpush.xpose.msra.mxu0 0.0
        %544 = vmatpush.xpose.msra.mxu0 0.0
        %545 = vmatpush.xpose.msra.mxu0 0.0
        %546 = vmatpush.xpose.msra.mxu0 0.0
        %547 = vmatpush.xpose.msra.mxu0 0.0
        %v548 = vand.u32 %v407, 4294901760
        %549 = vmatpush.xpose.msra.mxu0 %v548
        %v550 = vand.u32 %v404, 4294901760
        %551 = vmatmul.f32.gmra.mxu0 %v550
        %v552 = vpop.f32.mrf.mxu0
        %v553 = vadd.f32 %v531, %v552
        %554 = vdwg.mxu0
        %v556 = vsel %vm250, %v244, 0
        %v559 = vsel %vm250, %v248, 0
        %561 = vmatpush.xpose.msra.mxu0 0.0
        %562 = vmatpush.xpose.msra.mxu0 0.0
        %563 = vmatpush.xpose.msra.mxu0 0.0
        %564 = vmatpush.xpose.msra.mxu0 0.0
        %565 = vmatpush.xpose.msra.mxu0 0.0
        %566 = vmatpush.xpose.msra.mxu0 0.0
        %567 = vmatpush.xpose.msra.mxu0 0.0
        %568 = vmatpush.xpose.msra.mxu0 0.0
        %569 = vmatpush.xpose.msra.mxu0 0.0
        %570 = vmatpush.xpose.msra.mxu0 0.0
        %571 = vmatpush.xpose.msra.mxu0 0.0
        %572 = vmatpush.xpose.msra.mxu0 0.0
        %573 = vmatpush.xpose.msra.mxu0 0.0
        %574 = vmatpush.xpose.msra.mxu0 0.0
        %575 = vmatpush.xpose.msra.mxu0 0.0
        %v576 = vand.u32 %v559, 4294901760
        %577 = vmatpush.xpose.msra.mxu0 %v576
        %v578 = vand.u32 %v556, 4294901760
        %v579 = vsub.f32 %v556, %v578
        %v580 = vand.u32 %v579, 4294901760
        %v581 = vsub.f32 %v579, %v580
        %v582 = vand.u32 %v581, 4294901760
        %583 = vmatmul.f32.gmra.mxu0 %v582
        %v584 = vpop.f32.mrf.mxu0
        %v585 = vadd.f32 0.0, %v584
        %586 = vdwg.mxu0
        %587 = vmatpush.xpose.msra.mxu0 0.0
        %588 = vmatpush.xpose.msra.mxu0 0.0
        %589 = vmatpush.xpose.msra.mxu0 0.0
        %590 = vmatpush.xpose.msra.mxu0 0.0
        %591 = vmatpush.xpose.msra.mxu0 0.0
        %592 = vmatpush.xpose.msra.mxu0 0.0
        %593 = vmatpush.xpose.msra.mxu0 0.0
        %594 = vmatpush.xpose.msra.mxu0 0.0
        %595 = vmatpush.xpose.msra.mxu0 0.0
        %596 = vmatpush.xpose.msra.mxu0 0.0
        %597 = vmatpush.xpose.msra.mxu0 0.0
        %598 = vmatpush.xpose.msra.mxu0 0.0
        %599 = vmatpush.xpose.msra.mxu0 0.0
        %600 = vmatpush.xpose.msra.mxu0 0.0
        %601 = vmatpush.xpose.msra.mxu0 0.0
        %v602 = vand.u32 %v559, 4294901760
        %v603 = vsub.f32 %v559, %v602
        %v604 = vand.u32 %v603, 4294901760
        %v605 = vsub.f32 %v603, %v604
        %v606 = vand.u32 %v605, 4294901760
        %607 = vmatpush.xpose.msra.mxu0 %v606
        %v608 = vand.u32 %v556, 4294901760
        %609 = vmatmul.f32.gmra.mxu0 %v608
        %v610 = vpop.f32.mrf.mxu0
        %v611 = vadd.f32 %v585, %v610
        %612 = vdwg.mxu0
        %613 = vmatpush.xpose.msra.mxu0 0.0
        %614 = vmatpush.xpose.msra.mxu0 0.0
        %615 = vmatpush.xpose.msra.mxu0 0.0
        %616 = vmatpush.xpose.msra.mxu0 0.0
        %617 = vmatpush.xpose.msra.mxu0 0.0
        %618 = vmatpush.xpose.msra.mxu0 0.0
        %619 = vmatpush.xpose.msra.mxu0 0.0
        %620 = vmatpush.xpose.msra.mxu0 0.0
        %621 = vmatpush.xpose.msra.mxu0 0.0
        %622 = vmatpush.xpose.msra.mxu0 0.0
        %623 = vmatpush.xpose.msra.mxu0 0.0
        %624 = vmatpush.xpose.msra.mxu0 0.0
        %625 = vmatpush.xpose.msra.mxu0 0.0
        %626 = vmatpush.xpose.msra.mxu0 0.0
        %627 = vmatpush.xpose.msra.mxu0 0.0
        %v628 = vand.u32 %v559, 4294901760
        %v629 = vsub.f32 %v559, %v628
        %630 = vmatpush.xpose.msra.mxu0 %v629
        %v631 = vand.u32 %v556, 4294901760
        %v632 = vsub.f32 %v556, %v631
        %633 = vmatmul.f32.gmra.mxu0 %v632
        %v634 = vpop.f32.mrf.mxu0
        %v635 = vadd.f32 %v611, %v634
        %636 = vdwg.mxu0
        %637 = vmatpush.xpose.msra.mxu0 0.0
        %638 = vmatpush.xpose.msra.mxu0 0.0
        %639 = vmatpush.xpose.msra.mxu0 0.0
        %640 = vmatpush.xpose.msra.mxu0 0.0
        %641 = vmatpush.xpose.msra.mxu0 0.0
        %642 = vmatpush.xpose.msra.mxu0 0.0
        %643 = vmatpush.xpose.msra.mxu0 0.0
        %644 = vmatpush.xpose.msra.mxu0 0.0
        %645 = vmatpush.xpose.msra.mxu0 0.0
        %646 = vmatpush.xpose.msra.mxu0 0.0
        %647 = vmatpush.xpose.msra.mxu0 0.0
        %648 = vmatpush.xpose.msra.mxu0 0.0
        %649 = vmatpush.xpose.msra.mxu0 0.0
        %650 = vmatpush.xpose.msra.mxu0 0.0
        %651 = vmatpush.xpose.msra.mxu0 0.0
        %v652 = vand.u32 %v559, 4294901760
        %653 = vmatpush.xpose.msra.mxu0 %v652
        %v654 = vand.u32 %v556, 4294901760
        %v655 = vsub.f32 %v556, %v654
        %v656 = vand.u32 %v655, 4294901760
        %657 = vmatmul.f32.gmra.mxu0 %v656
        %v658 = vpop.f32.mrf.mxu0
        %v659 = vadd.f32 %v635, %v658
        %660 = vdwg.mxu0
        %661 = vmatpush.xpose.msra.mxu0 0.0
        %662 = vmatpush.xpose.msra.mxu0 0.0
        %663 = vmatpush.xpose.msra.mxu0 0.0
        %664 = vmatpush.xpose.msra.mxu0 0.0
        %665 = vmatpush.xpose.msra.mxu0 0.0
        %666 = vmatpush.xpose.msra.mxu0 0.0
        %667 = vmatpush.xpose.msra.mxu0 0.0
        %668 = vmatpush.xpose.msra.mxu0 0.0
        %669 = vmatpush.xpose.msra.mxu0 0.0
        %670 = vmatpush.xpose.msra.mxu0 0.0
        %671 = vmatpush.xpose.msra.mxu0 0.0
        %672 = vmatpush.xpose.msra.mxu0 0.0
        %673 = vmatpush.xpose.msra.mxu0 0.0
        %674 = vmatpush.xpose.msra.mxu0 0.0
        %675 = vmatpush.xpose.msra.mxu0 0.0
        %v676 = vand.u32 %v559, 4294901760
        %v677 = vsub.f32 %v559, %v676
        %v678 = vand.u32 %v677, 4294901760
        %679 = vmatpush.xpose.msra.mxu0 %v678
        %v680 = vand.u32 %v556, 4294901760
        %681 = vmatmul.f32.gmra.mxu0 %v680
        %v682 = vpop.f32.mrf.mxu0
        %v683 = vadd.f32 %v659, %v682
        %684 = vdwg.mxu0
        %685 = vmatpush.xpose.msra.mxu0 0.0
        %686 = vmatpush.xpose.msra.mxu0 0.0
        %687 = vmatpush.xpose.msra.mxu0 0.0
        %688 = vmatpush.xpose.msra.mxu0 0.0
        %689 = vmatpush.xpose.msra.mxu0 0.0
        %690 = vmatpush.xpose.msra.mxu0 0.0
        %691 = vmatpush.xpose.msra.mxu0 0.0
        %692 = vmatpush.xpose.msra.mxu0 0.0
        %693 = vmatpush.xpose.msra.mxu0 0.0
        %694 = vmatpush.xpose.msra.mxu0 0.0
        %695 = vmatpush.xpose.msra.mxu0 0.0
        %696 = vmatpush.xpose.msra.mxu0 0.0
        %697 = vmatpush.xpose.msra.mxu0 0.0
        %698 = vmatpush.xpose.msra.mxu0 0.0
        %699 = vmatpush.xpose.msra.mxu0 0.0
        %v700 = vand.u32 %v559, 4294901760
        %701 = vmatpush.xpose.msra.mxu0 %v700
        %v702 = vand.u32 %v556, 4294901760
        %703 = vmatmul.f32.gmra.mxu0 %v702
        %v704 = vpop.f32.mrf.mxu0
        %v705 = vadd.f32 %v683, %v704
        %706 = vdwg.mxu0
        %v708 = vsel %vm250, %v245, 0
        %v711 = vsel %vm250, %v249, 0
        %713 = vmatpush.xpose.msra.mxu0 0.0
        %714 = vmatpush.xpose.msra.mxu0 0.0
        %715 = vmatpush.xpose.msra.mxu0 0.0
        %716 = vmatpush.xpose.msra.mxu0 0.0
        %717 = vmatpush.xpose.msra.mxu0 0.0
        %718 = vmatpush.xpose.msra.mxu0 0.0
        %719 = vmatpush.xpose.msra.mxu0 0.0
        %720 = vmatpush.xpose.msra.mxu0 0.0
        %721 = vmatpush.xpose.msra.mxu0 0.0
        %722 = vmatpush.xpose.msra.mxu0 0.0
        %723 = vmatpush.xpose.msra.mxu0 0.0
        %724 = vmatpush.xpose.msra.mxu0 0.0
        %725 = vmatpush.xpose.msra.mxu0 0.0
        %726 = vmatpush.xpose.msra.mxu0 0.0
        %727 = vmatpush.xpose.msra.mxu0 0.0
        %v728 = vand.u32 %v711, 4294901760
        %729 = vmatpush.xpose.msra.mxu0 %v728
        %v730 = vand.u32 %v708, 4294901760
        %v731 = vsub.f32 %v708, %v730
        %v732 = vand.u32 %v731, 4294901760
        %v733 = vsub.f32 %v731, %v732
        %v734 = vand.u32 %v733, 4294901760
        %735 = vmatmul.f32.gmra.mxu0 %v734
        %v736 = vpop.f32.mrf.mxu0
        %v737 = vadd.f32 0.0, %v736
        %738 = vdwg.mxu0
        %739 = vmatpush.xpose.msra.mxu0 0.0
        %740 = vmatpush.xpose.msra.mxu0 0.0
        %741 = vmatpush.xpose.msra.mxu0 0.0
        %742 = vmatpush.xpose.msra.mxu0 0.0
        %743 = vmatpush.xpose.msra.mxu0 0.0
        %744 = vmatpush.xpose.msra.mxu0 0.0
        %745 = vmatpush.xpose.msra.mxu0 0.0
        %746 = vmatpush.xpose.msra.mxu0 0.0
        %747 = vmatpush.xpose.msra.mxu0 0.0
        %748 = vmatpush.xpose.msra.mxu0 0.0
        %749 = vmatpush.xpose.msra.mxu0 0.0
        %750 = vmatpush.xpose.msra.mxu0 0.0
        %751 = vmatpush.xpose.msra.mxu0 0.0
        %752 = vmatpush.xpose.msra.mxu0 0.0
        %753 = vmatpush.xpose.msra.mxu0 0.0
        %v754 = vand.u32 %v711, 4294901760
        %v755 = vsub.f32 %v711, %v754
        %v756 = vand.u32 %v755, 4294901760
        %v757 = vsub.f32 %v755, %v756
        %v758 = vand.u32 %v757, 4294901760
        %759 = vmatpush.xpose.msra.mxu0 %v758
        %v760 = vand.u32 %v708, 4294901760
        %761 = vmatmul.f32.gmra.mxu0 %v760
        %v762 = vpop.f32.mrf.mxu0
        %v763 = vadd.f32 %v737, %v762
        %764 = vdwg.mxu0
        %765 = vmatpush.xpose.msra.mxu0 0.0
        %766 = vmatpush.xpose.msra.mxu0 0.0
        %767 = vmatpush.xpose.msra.mxu0 0.0
        %768 = vmatpush.xpose.msra.mxu0 0.0
        %769 = vmatpush.xpose.msra.mxu0 0.0
        %770 = vmatpush.xpose.msra.mxu0 0.0
        %771 = vmatpush.xpose.msra.mxu0 0.0
        %772 = vmatpush.xpose.msra.mxu0 0.0
        %773 = vmatpush.xpose.msra.mxu0 0.0
        %774 = vmatpush.xpose.msra.mxu0 0.0
        %775 = vmatpush.xpose.msra.mxu0 0.0
        %776 = vmatpush.xpose.msra.mxu0 0.0
        %777 = vmatpush.xpose.msra.mxu0 0.0
        %778 = vmatpush.xpose.msra.mxu0 0.0
        %779 = vmatpush.xpose.msra.mxu0 0.0
        %v780 = vand.u32 %v711, 4294901760
        %v781 = vsub.f32 %v711, %v780
        %782 = vmatpush.xpose.msra.mxu0 %v781
        %v783 = vand.u32 %v708, 4294901760
        %v784 = vsub.f32 %v708, %v783
        %785 = vmatmul.f32.gmra.mxu0 %v784
        %v786 = vpop.f32.mrf.mxu0
        %v787 = vadd.f32 %v763, %v786
        %788 = vdwg.mxu0
        %789 = vmatpush.xpose.msra.mxu0 0.0
        %790 = vmatpush.xpose.msra.mxu0 0.0
        %791 = vmatpush.xpose.msra.mxu0 0.0
        %792 = vmatpush.xpose.msra.mxu0 0.0
        %793 = vmatpush.xpose.msra.mxu0 0.0
        %794 = vmatpush.xpose.msra.mxu0 0.0
        %795 = vmatpush.xpose.msra.mxu0 0.0
        %796 = vmatpush.xpose.msra.mxu0 0.0
        %797 = vmatpush.xpose.msra.mxu0 0.0
        %798 = vmatpush.xpose.msra.mxu0 0.0
        %799 = vmatpush.xpose.msra.mxu0 0.0
        %800 = vmatpush.xpose.msra.mxu0 0.0
        %801 = vmatpush.xpose.msra.mxu0 0.0
        %802 = vmatpush.xpose.msra.mxu0 0.0
        %803 = vmatpush.xpose.msra.mxu0 0.0
        %v804 = vand.u32 %v711, 4294901760
        %805 = vmatpush.xpose.msra.mxu0 %v804
        %v806 = vand.u32 %v708, 4294901760
        %v807 = vsub.f32 %v708, %v806
        %v808 = vand.u32 %v807, 4294901760
        %809 = vmatmul.f32.gmra.mxu0 %v808
        %v810 = vpop.f32.mrf.mxu0
        %v811 = vadd.f32 %v787, %v810
        %812 = vdwg.mxu0
        %813 = vmatpush.xpose.msra.mxu0 0.0
        %814 = vmatpush.xpose.msra.mxu0 0.0
        %815 = vmatpush.xpose.msra.mxu0 0.0
        %816 = vmatpush.xpose.msra.mxu0 0.0
        %817 = vmatpush.xpose.msra.mxu0 0.0
        %818 = vmatpush.xpose.msra.mxu0 0.0
        %819 = vmatpush.xpose.msra.mxu0 0.0
        %820 = vmatpush.xpose.msra.mxu0 0.0
        %821 = vmatpush.xpose.msra.mxu0 0.0
        %822 = vmatpush.xpose.msra.mxu0 0.0
        %823 = vmatpush.xpose.msra.mxu0 0.0
        %824 = vmatpush.xpose.msra.mxu0 0.0
        %825 = vmatpush.xpose.msra.mxu0 0.0
        %826 = vmatpush.xpose.msra.mxu0 0.0
        %827 = vmatpush.xpose.msra.mxu0 0.0
        %v828 = vand.u32 %v711, 4294901760
        %v829 = vsub.f32 %v711, %v828
        %v830 = vand.u32 %v829, 4294901760
        %831 = vmatpush.xpose.msra.mxu0 %v830
        %v832 = vand.u32 %v708, 4294901760
        %833 = vmatmul.f32.gmra.mxu0 %v832
        %v834 = vpop.f32.mrf.mxu0
        %v835 = vadd.f32 %v811, %v834
        %836 = vdwg.mxu0
        %837 = vmatpush.xpose.msra.mxu0 0.0
        %838 = vmatpush.xpose.msra.mxu0 0.0
        %839 = vmatpush.xpose.msra.mxu0 0.0
        %840 = vmatpush.xpose.msra.mxu0 0.0
        %841 = vmatpush.xpose.msra.mxu0 0.0
        %842 = vmatpush.xpose.msra.mxu0 0.0
        %843 = vmatpush.xpose.msra.mxu0 0.0
        %844 = vmatpush.xpose.msra.mxu0 0.0
        %845 = vmatpush.xpose.msra.mxu0 0.0
        %846 = vmatpush.xpose.msra.mxu0 0.0
        %847 = vmatpush.xpose.msra.mxu0 0.0
        %848 = vmatpush.xpose.msra.mxu0 0.0
        %849 = vmatpush.xpose.msra.mxu0 0.0
        %850 = vmatpush.xpose.msra.mxu0 0.0
        %851 = vmatpush.xpose.msra.mxu0 0.0
        %v852 = vand.u32 %v711, 4294901760
        %853 = vmatpush.xpose.msra.mxu0 %v852
        %v854 = vand.u32 %v708, 4294901760
        %855 = vmatmul.f32.gmra.mxu0 %v854
        %v856 = vpop.f32.mrf.mxu0
        %v857 = vadd.f32 %v835, %v856
        %858 = vdwg.mxu0
        %vm859 = vcmask 64512
        %860 = vst.msk [vmem:[%s234] sm:$0xff] %vm859, %v401
        %861 = vst.msk [vmem:[%s234 + $0x8] sm:$0xff] %vm859, %v553
        %862 = vst.msk [vmem:[%s234 + $0x10] sm:$0xff] %vm859, %v705
        %863 = vst.msk [vmem:[%s234 + $0x18] sm:$0xff] %vm859, %v857
        %s864 = sand.u32 %s109, 1
        %s865 = scalar_lea.sflag [#allocation4], %s864
        %s866 = sand.u32 %s109, 1
        %s867 = smul.addr %s866, 32
        %s868 = scalar_lea.vmem [#allocation7], %s867
        // Predicated region
        $region37: #{tpu_custom_call.1} parent=27 // pred_check
          %p869 = pneg %p119
        $region38: #{tpu_custom_call.1} parent=27 // pred_check_branch
          %871 = sbr.rel (%p869) target = $region40
        $region39: #{tpu_custom_call.1} parent=27 // pred_region
          %s872 = smul.u32 4, %s27
          %874 = vsyncadd %s865, 0
          %s875 = sadd.s32 %s29, %s28
          %s876 = sadd.s32 %s875, %s872
          %s877 = smul.addr %s876, 8
          %s878 = scalar_lea.hbm %s2, %s877
          %s879 = sshll.u32 %s868, 4
          %s880 = int_to_ptr.vmem [resolvable:$true] %s879
          %s881 = sshll.u32 %s878, 4
          %s882 = int_to_ptr.hbm [resolvable:$true] %s881
          %887 = dma.vmem_to_hbm [thread:$0]  %s880, 512, %s882, %s865, 128, 128, 8
        $region40: #{tpu_custom_call.1} parent=27 // pred_fallthru
          _
      $region28: #{tpu_custom_call.1} parent=5 // pred_fallthru
        _
      %p888 = scmp.le.s32.totalorder 2, %s17
      // Predicated region
      $region41: #{tpu_custom_call.1} parent=5 // pred_check
        %p889 = pneg %p888
      $region42: #{tpu_custom_call.1} parent=5 // pred_check_branch
        %891 = sbr.rel (%p889) target = $region44
      $region43: #{tpu_custom_call.1} parent=5 // pred_region
        %s892 = ssub.s32 %s17, 2
        // Predicated region
        $region45: #{tpu_custom_call.1} parent=43 // pred_check
          %p893 = pneg %p125
        $region46: #{tpu_custom_call.1} parent=43 // pred_check_branch
          %895 = sbr.rel (%p893) target = $region48
        $region47: #{tpu_custom_call.1} parent=43 // pred_region
          %s896 = sand.u32 %s110, 1
          %s897 = scalar_lea.sflag [#allocation4], %s896
          %s898 = sand.u32 %s110, 1
          %s899 = smul.addr %s898, 32
          %s900 = scalar_lea.vmem [#allocation7], %s899
          %902 = dma.done %s897, 512
        $region48: #{tpu_custom_call.1} parent=43 // pred_fallthru
          _
      $region44: #{tpu_custom_call.1} parent=5 // pred_fallthru
        _
    $region6: #{tpu_custom_call.1} parent=1 // loop_footer
      %s21 = sadd.s32 1, %s17
    $region7: #{tpu_custom_call.1} parent=1 // loop_footer_branch
      %16 = sbr.rel target = $region3
    $region8: #{tpu_custom_call.1} parent=1 // loop_exit
      _
    %903 = vsyncpa [#allocation3], 1
    %s904 = scalar_lea.sflag [#allocation3], 1
    %905 = vsyncpa %s904, 1
    %906 = vsyncpa [#allocation6], 1
    %s907 = scalar_lea.sflag [#allocation6], 1
    %908 = vsyncpa %s907, 1
    %909 = vsyncpa [#allocation4], 1
    %s910 = scalar_lea.sflag [#allocation4], 1
    %911 = vsyncpa %s910, 1

</llo_original>
